<compile_context>
chip_gen: v6e
topology: v6e:2x2x1
jax: 0.10.0
libtpu: 0.0.40
codegen_flags: <defaults>
</compile_context>

<pallas_src>
import functools

import jax
import jax.numpy as jnp
import numpy as np
from jax.experimental import pallas as pl
from jax.experimental.pallas import tpu as pltpu


def _round_up(x, m):
    return (x + m - 1) // m * m


def _unet_down_kernel(*refs, ho, wo, normalize, eps):
    """One (sample, Cout-tile) block.

    refs (normalize=True):  x_ref, w_ref, o_ref
    refs (normalize=False): x_ref, w_ref, b_ref, o_ref

    x_ref: (1, Ho+1, Wo+1, 4*Cin_p)  parity-folded, LeakyReLU'd, padded input (bf16)
    w_ref: (4, 4*Cin_p, tCo)         per-shift-group weights, group = (di//2)*2 + (dj//2)
    b_ref: (1, tCo)                  f32 bias (only present when normalize=False)
    o_ref: (1, P, tCo)               output, P = Ho*Wo
    """
    if normalize:
        x_ref, w_ref, o_ref = refs
        b_ref = None
    else:
        x_ref, w_ref, b_ref, o_ref = refs

    p = ho * wo
    k4 = x_ref.shape[-1]
    t_co = o_ref.shape[2]

    xg = x_ref[0]                                   # (Ho+1, Wo+1, 4*Cin_p)
    acc = jnp.zeros((p, t_co), jnp.float32)

    # Conv2d(k=4, s=2, p=1): the 4 within-stride taps (di%2, dj%2) are already folded
    # into the channel axis, so only the 4 unit-stride shift groups (a, c) = (di//2, dj//2)
    # remain -> 4 accumulated matmuls with K = 4*Cin_p on the MXU (f32 accumulation).
    for a in range(2):
        for c in range(2):
            lhs = xg[a:a + ho, c:c + wo, :].reshape(p, k4)
            acc = acc + jnp.dot(lhs, w_ref[2 * a + c],
                                preferred_element_type=jnp.float32)

    if normalize:
        # InstanceNorm2d(affine=False, eps=1e-5): per-channel stats over the P axis.
        # Bias is skipped (it cancels exactly); two-pass variance avoids cancellation.
        mean = jnp.mean(acc, axis=0, keepdims=True)
        d = acc - mean
        var = jnp.mean(d * d, axis=0, keepdims=True)
        y = d * jax.lax.rsqrt(var + eps)
    else:
        y = acc + b_ref[...]

    o_ref[0] = y.astype(o_ref.dtype)


def unet_down_nhwc(x, weight, bias=None, *, normalize=True, negative_slope=0.2,
                   eps=1e-5, compute_dtype=jnp.bfloat16, out_dtype=jnp.bfloat16):
    """UNetDown on NHWC input -> NHWC output (preferred entry point for chaining)."""
    n, h, w_sp, cin = x.shape
    cout = weight.shape[0]
    assert weight.shape == (cout, cin, 4, 4)
    assert h % 2 == 0 and w_sp % 2 == 0, "UNetDown expects even spatial dims"
    if not normalize:
        assert bias is not None and bias.shape == (cout,)
    ho, wo = h // 2, w_sp // 2
    p = ho * wo

    cin_p = _round_up(cin, 8)
    k4 = 4 * cin_p
    if cout <= 128:
        cout_p, t_co = cout, cout
    else:
        cout_p = _round_up(cout, 128)
        t_co = 256 if cout_p % 256 == 0 else 128
    n_co = cout_p // t_co

    # --- Host pass (single fused elementwise + permutation over the padded input) ---
    # LeakyReLU (leaky(0)==0, so the conv zero padding is preserved), channel pad,
    # parity fold (rows/cols split into stride-2 position and parity), bf16 cast:
    #   xg[n, R, S, (b, d, ci)] = leaky(xpad[n, 2R + b, 2S + d, ci])
    xpad = jnp.pad(x, ((0, 0), (1, 1), (1, 1), (0, cin_p - cin)))
    xr = jnp.where(xpad >= 0, xpad, negative_slope * xpad)
    xg = xr.reshape(n, ho + 1, 2, wo + 1, 2, cin_p)
    xg = jnp.transpose(xg, (0, 1, 3, 2, 4, 5)).reshape(n, ho + 1, wo + 1, k4)
    xg = xg.astype(compute_dtype)

    # Weights: (Cout, Cin, 4, 4) -> (4 shift groups (a,c), K=(b,d,ci)=4*Cin_p, Cout_p)
    # with di = 2a + b, dj = 2c + d, matching xg's channel order.
    wg = weight.reshape(cout, cin, 2, 2, 2, 2)          # (co, ci, a, b, c, d)
    wg = jnp.transpose(wg, (2, 4, 3, 5, 1, 0))          # (a, c, b, d, ci, co)
    wg = jnp.pad(wg, ((0, 0), (0, 0), (0, 0), (0, 0),
                      (0, cin_p - cin), (0, cout_p - cout)))
    wg = wg.reshape(4, k4, cout_p).astype(compute_dtype)

    # --- Grid order by traffic: keep the heavier operand resident across the inner axis.
    itm = jnp.dtype(compute_dtype).itemsize
    x_blk_raw = (ho + 1) * (wo + 1) * k4 * itm
    w_blk_raw = 4 * k4 * t_co * itm
    weight_resident = (w_blk_raw > x_blk_raw) and (n > 1)

    if weight_resident:
        grid = (n_co, n)          # batch innermost: weight tile resident across samples
        xmap = lambda co, ni: (ni, 0, 0, 0)
        wmap = lambda co, ni: (0, 0, co)
        bmap = lambda co, ni: (0, co)
        omap = lambda co, ni: (ni, 0, co)
    else:
        grid = (n, n_co)          # Cout-tiles innermost: input block resident across them
        xmap = lambda ni, co: (ni, 0, 0, 0)
        wmap = lambda ni, co: (0, 0, co)
        bmap = lambda ni, co: (0, co)
        omap = lambda ni, co: (ni, 0, co)

    in_specs = [pl.BlockSpec((1, ho + 1, wo + 1, k4), xmap),
                pl.BlockSpec((4, k4, t_co), wmap)]
    operands = [xg, wg]
    if not normalize:
        b_pad = jnp.pad(bias.astype(jnp.float32), (0, cout_p - cout)).reshape(1, cout_p)
        in_specs.append(pl.BlockSpec((1, t_co), bmap))
        operands.append(b_pad)
    out_specs = pl.BlockSpec((1, p, t_co), omap)

    # --- VMEM budget: double-buffered pipeline blocks + in-kernel live temporaries,
    # clamped to the current generation's capacity minus headroom (v5e/v6e ~112 MiB,
    # v7x ~56 MiB).
    out_itm = jnp.dtype(out_dtype).itemsize
    sub_c = 8 * (4 // itm)
    sub_o = 8 * (4 // out_itm)
    x_blk = (ho + 1) * _round_up(wo + 1, sub_c) * _round_up(k4, 128) * itm
    w_blk = 4 * _round_up(k4, sub_c) * _round_up(t_co, 128) * itm
    o_blk = _round_up(p, sub_o) * _round_up(t_co, 128) * out_itm
    b_blk = 0 if normalize else 8 * _round_up(t_co, 128) * 4
    live = (3 * _round_up(p, 8) * _round_up(t_co, 128) * 4
            + 2 * _round_up(p, sub_c) * _round_up(k4, 128) * itm)
    try:
        cap = int(pltpu.get_tpu_info().vmem_capacity_bytes)
    except Exception:
        cap = 64 << 20            # conservative fallback
    cap_limit = cap - max(cap // 8, 8 << 20)
    needed = 2 * (x_blk + w_blk + o_blk + b_blk) + live + (4 << 20)
    vmem_limit = int(max(16 << 20, min(cap_limit, needed)))

    kernel = functools.partial(_unet_down_kernel, ho=ho, wo=wo,
                               normalize=normalize, eps=eps)

    out = pl.pallas_call(
        kernel,
        out_shape=jax.ShapeDtypeStruct((n, p, cout_p), out_dtype),
        grid_spec=pltpu.PrefetchScalarGridSpec(
            num_scalar_prefetch=0,
            grid=grid,
            in_specs=in_specs,
            out_specs=out_specs,
        ),
        compiler_params=pltpu.CompilerParams(
            dimension_semantics=("parallel", "parallel"),
            vmem_limit_bytes=vmem_limit),
    )(*operands)

    if cout_p > cout:
        out = out[:, :, :cout]
    return out.reshape(n, ho, wo, cout)


def unet_down(x, weight, bias=None, **kwargs):
    """PyTorch-parity entry point: NCHW in, NCHW out.

    For chained UNetDown blocks prefer `unet_down_nhwc` (bf16 NHWC end-to-end,
    no boundary transposes, Cout stays on the lane axis)."""
    y = unet_down_nhwc(jnp.transpose(x, (0, 2, 3, 1)), weight, bias, **kwargs)
    return jnp.transpose(y, (0, 3, 1, 2))


def _reference(x, weight, bias, *, normalize=True, negative_slope=0.2, eps=1e-5,
               compute_dtype=jnp.bfloat16):
    """Pure-JAX NCHW reference mirroring the PyTorch forward pass and the kernel's
    mixed-precision policy (LeakyReLU in f32, bf16 conv operands, f32 accum/stats)."""
    f32 = jnp.float32
    xr = jnp.where(x >= 0, x, negative_slope * x)
    xr = xr.astype(compute_dtype).astype(f32)
    wq = weight.astype(compute_dtype).astype(f32)
    y = jax.lax.conv_general_dilated(
        xr, wq, window_strides=(2, 2), padding=((1, 1), (1, 1)),
        dimension_numbers=("NCHW", "OIHW", "NCHW"),
        precision=jax.lax.Precision.HIGHEST)
    y = y + bias.reshape(1, -1, 1, 1)
    if normalize:
        mean = jnp.mean(y, axis=(2, 3), keepdims=True)
        var = jnp.mean((y - mean) ** 2, axis=(2, 3), keepdims=True)
        y = (y - mean) * jax.lax.rsqrt(var + eps)
    return y


if __name__ == "__main__":
    key = jax.random.PRNGKey(0)
    kx, kw, kb, kx2, kw2, kb2 = jax.random.split(key, 6)

    # --- Config 1: small UNetDown block (input-resident grid order) -------------------
    N, Cin, Cout, H, W = 2, 4, 8, 16, 16
    x = jax.random.normal(kx, (N, Cin, H, W), dtype=jnp.float32)
    bound = 1.0 / np.sqrt(Cin * 4 * 4)        # PyTorch Conv2d default init bound
    weight = jax.random.uniform(kw, (Cout, Cin, 4, 4), jnp.float32, -bound, bound)
    bias = jax.random.uniform(kb, (Cout,), jnp.float32, -bound, bound)

    for norm in (True, False):
        out = jax.block_until_ready(
            unet_down(x, weight, bias, normalize=norm, out_dtype=jnp.float32))
        ref = _reference(x, weight, bias, normalize=norm)
        np.testing.assert_allclose(np.asarray(out), np.asarray(ref),
                                   rtol=1e-3, atol=1e-3)
        assert out.shape == (N, Cout, H // 2, W // 2)

    # Default bf16-output path (HBM-traffic optimized).
    out_bf = jax.block_until_ready(unet_down(x, weight, bias, normalize=True))
    assert out_bf.dtype == jnp.bfloat16
    np.testing.assert_allclose(np.asarray(out_bf, dtype=np.float32),
                               np.asarray(_reference(x, weight, bias, normalize=True)),
                               rtol=2e-2, atol=2e-2)

    # --- Config 2: deeper layer (weight-resident grid order, full-K MXU tiles) --------
    N2, Cin2, Cout2, H2, W2 = 2, 32, 256, 8, 8
    x2 = jax.random.normal(kx2, (N2, Cin2, H2, W2), dtype=jnp.float32)
    bound2 = 1.0 / np.sqrt(Cin2 * 4 * 4)
    weight2 = jax.random.uniform(kw2, (Cout2, Cin2, 4, 4), jnp.float32, -bound2, bound2)
    bias2 = jax.random.uniform(kb2, (Cout2,), jnp.float32, -bound2, bound2)
    out2 = jax.block_until_ready(unet_down(x2, weight2, bias2, normalize=True))
    np.testing.assert_allclose(np.asarray(out2, dtype=np.float32),
                               np.asarray(_reference(x2, weight2, bias2, normalize=True)),
                               rtol=2e-2, atol=2e-2)
    assert out2.shape == (N2, Cout2, H2 // 2, W2 // 2)

    print("KERNEL_OK")
</pallas_src>

<mosaic_0001>
module attributes {stable_mosaic.version = 11 : i64} {
  func.func @_unet_down_kernel(%arg0: i32, %arg1: i32, %arg2: memref<1x9x9x32xbf16, #tpu.memory_space<vmem>>, %arg3: memref<4x32x8xbf16, #tpu.memory_space<vmem>>, %arg4: memref<1x64x8xf32, #tpu.memory_space<vmem>>) attributes {dimension_semantics = [#tpu.dimension_semantics<parallel>, #tpu.dimension_semantics<parallel>], iteration_bounds = array<i64: 2, 1>, scalar_prefetch = 0 : i64, scratch_operands = 0 : i64, tpu.core_type = #tpu.core_type<tc>, window_params = [{transform_indices = @transform_0, window_bounds = array<i64: 1, 9, 9, 32>}, {transform_indices = @transform_1, window_bounds = array<i64: 4, 32, 8>}, {transform_indices = @transform_2, window_bounds = array<i64: 1, 64, 8>}]} {
    %c0 = arith.constant 0 : index
    %c0_0 = arith.constant 0 : index
    %c0_1 = arith.constant 0 : index
    %c0_2 = arith.constant 0 : index
    %0 = vector.load %arg2[%c0, %c0_0, %c0_1, %c0_2] : memref<1x9x9x32xbf16, #tpu.memory_space<vmem>>, vector<1x9x9x32xbf16>
    %1 = vector.shape_cast %0 : vector<1x9x9x32xbf16> to vector<9x9x32xbf16>
    %cst = arith.constant 0.000000e+00 : f32
    %2 = vector.broadcast %cst : f32 to vector<64x8xf32>
    %3 = vector.extract_strided_slice %1 {offsets = [0, 0, 0], sizes = [8, 8, 32], strides = [1, 1, 1]} : vector<9x9x32xbf16> to vector<8x8x32xbf16>
    %4 = vector.shape_cast %3 : vector<8x8x32xbf16> to vector<64x32xbf16>
    %c0_3 = arith.constant 0 : index
    %c0_4 = arith.constant 0 : index
    %c0_5 = arith.constant 0 : index
    %5 = vector.load %arg3[%c0_3, %c0_4, %c0_5] : memref<4x32x8xbf16, #tpu.memory_space<vmem>>, vector<1x32x8xbf16>
    %6 = vector.shape_cast %5 : vector<1x32x8xbf16> to vector<32x8xbf16>
    %cst_6 = arith.constant dense<0.000000e+00> : vector<64x8xf32>
    %7 = tpu.matmul %4, %6, %cst_6 {dimension_numbers = #tpu.dot_dimension_numbers<[1], [0], [0], [1], [0, 0, 1, 1], [], []>} : vector<64x32xbf16>, vector<32x8xbf16>, vector<64x8xf32> -> vector<64x8xf32>
    %8 = arith.addf %2, %7 : vector<64x8xf32>
    %9 = vector.extract_strided_slice %1 {offsets = [0, 1, 0], sizes = [8, 8, 32], strides = [1, 1, 1]} : vector<9x9x32xbf16> to vector<8x8x32xbf16>
    %10 = vector.shape_cast %9 : vector<8x8x32xbf16> to vector<64x32xbf16>
    %c1 = arith.constant 1 : index
    %c0_7 = arith.constant 0 : index
    %c0_8 = arith.constant 0 : index
    %11 = vector.load %arg3[%c1, %c0_7, %c0_8] : memref<4x32x8xbf16, #tpu.memory_space<vmem>>, vector<1x32x8xbf16>
    %12 = vector.shape_cast %11 : vector<1x32x8xbf16> to vector<32x8xbf16>
    %cst_9 = arith.constant dense<0.000000e+00> : vector<64x8xf32>
    %13 = tpu.matmul %10, %12, %cst_9 {dimension_numbers = #tpu.dot_dimension_numbers<[1], [0], [0], [1], [0, 0, 1, 1], [], []>} : vector<64x32xbf16>, vector<32x8xbf16>, vector<64x8xf32> -> vector<64x8xf32>
    %14 = arith.addf %8, %13 : vector<64x8xf32>
    %15 = vector.extract_strided_slice %1 {offsets = [1, 0, 0], sizes = [8, 8, 32], strides = [1, 1, 1]} : vector<9x9x32xbf16> to vector<8x8x32xbf16>
    %16 = vector.shape_cast %15 : vector<8x8x32xbf16> to vector<64x32xbf16>
    %c2 = arith.constant 2 : index
    %c0_10 = arith.constant 0 : index
    %c0_11 = arith.constant 0 : index
    %17 = vector.load %arg3[%c2, %c0_10, %c0_11] : memref<4x32x8xbf16, #tpu.memory_space<vmem>>, vector<1x32x8xbf16>
    %18 = vector.shape_cast %17 : vector<1x32x8xbf16> to vector<32x8xbf16>
    %cst_12 = arith.constant dense<0.000000e+00> : vector<64x8xf32>
    %19 = tpu.matmul %16, %18, %cst_12 {dimension_numbers = #tpu.dot_dimension_numbers<[1], [0], [0], [1], [0, 0, 1, 1], [], []>} : vector<64x32xbf16>, vector<32x8xbf16>, vector<64x8xf32> -> vector<64x8xf32>
    %20 = arith.addf %14, %19 : vector<64x8xf32>
    %21 = vector.extract_strided_slice %1 {offsets = [1, 1, 0], sizes = [8, 8, 32], strides = [1, 1, 1]} : vector<9x9x32xbf16> to vector<8x8x32xbf16>
    %22 = vector.shape_cast %21 : vector<8x8x32xbf16> to vector<64x32xbf16>
    %c3 = arith.constant 3 : index
    %c0_13 = arith.constant 0 : index
    %c0_14 = arith.constant 0 : index
    %23 = vector.load %arg3[%c3, %c0_13, %c0_14] : memref<4x32x8xbf16, #tpu.memory_space<vmem>>, vector<1x32x8xbf16>
    %24 = vector.shape_cast %23 : vector<1x32x8xbf16> to vector<32x8xbf16>
    %cst_15 = arith.constant dense<0.000000e+00> : vector<64x8xf32>
    %25 = tpu.matmul %22, %24, %cst_15 {dimension_numbers = #tpu.dot_dimension_numbers<[1], [0], [0], [1], [0, 0, 1, 1], [], []>} : vector<64x32xbf16>, vector<32x8xbf16>, vector<64x8xf32> -> vector<64x8xf32>
    %26 = arith.addf %20, %25 : vector<64x8xf32>
    %cst_16 = arith.constant dense<0.000000e+00> : vector<8xf32>
    %27 = vector.multi_reduction <add>, %26, %cst_16 [0] : vector<64x8xf32> to vector<8xf32>
    %28 = vector.shape_cast %27 : vector<8xf32> to vector<1x8xf32>
    %cst_17 = arith.constant 6.400000e+01 : f32
    %29 = vector.broadcast %cst_17 : f32 to vector<1x8xf32>
    %30 = arith.divf %28, %29 : vector<1x8xf32>
    %31 = vector.broadcast %30 : vector<1x8xf32> to vector<64x8xf32>
    %32 = arith.subf %26, %31 : vector<64x8xf32>
    %33 = arith.mulf %32, %32 : vector<64x8xf32>
    %cst_18 = arith.constant dense<0.000000e+00> : vector<8xf32>
    %34 = vector.multi_reduction <add>, %33, %cst_18 [0] : vector<64x8xf32> to vector<8xf32>
    %35 = vector.shape_cast %34 : vector<8xf32> to vector<1x8xf32>
    %cst_19 = arith.constant 6.400000e+01 : f32
    %36 = vector.broadcast %cst_19 : f32 to vector<1x8xf32>
    %37 = arith.divf %35, %36 : vector<1x8xf32>
    %cst_20 = arith.constant 9.99999974E-6 : f32
    %38 = vector.broadcast %cst_20 : f32 to vector<1x8xf32>
    %39 = arith.addf %37, %38 : vector<1x8xf32>
    %40 = math.rsqrt %39 : vector<1x8xf32>
    %41 = vector.broadcast %40 : vector<1x8xf32> to vector<64x8xf32>
    %42 = arith.mulf %32, %41 : vector<64x8xf32>
    %c0_21 = arith.constant 0 : index
    %c0_22 = arith.constant 0 : index
    %c0_23 = arith.constant 0 : index
    %43 = vector.load %arg4[%c0_21, %c0_22, %c0_23] : memref<1x64x8xf32, #tpu.memory_space<vmem>>, vector<1x64x8xf32>
    %44 = vector.shape_cast %43 : vector<1x64x8xf32> to vector<64x8xf32>
    %45 = vector.shape_cast %42 : vector<64x8xf32> to vector<1x64x8xf32>
    tpu.vector_store %arg4[%c0_21, %c0_22, %c0_23], %45 {strides = array<i32>} : memref<1x64x8xf32, #tpu.memory_space<vmem>>, vector<1x64x8xf32>,
    return
  }
  func.func @transform_0(%arg0: i32, %arg1: i32) -> (i32, i32, i32, i32) {
    %c0_i32 = arith.constant 0 : i32
    %c0_i32_0 = arith.constant 0 : i32
    %c0_i32_1 = arith.constant 0 : i32
    %c0_i32_2 = arith.constant 0 : i32
    return %arg0, %c0_i32, %c0_i32_0, %c0_i32_1 : i32, i32, i32, i32
  }
  func.func @transform_1(%arg0: i32, %arg1: i32) -> (i32, i32, i32) {
    %c0_i32 = arith.constant 0 : i32
    %c0_i32_0 = arith.constant 0 : i32
    %c0_i32_1 = arith.constant 0 : i32
    return %c0_i32, %c0_i32_0, %arg1 : i32, i32, i32
  }
  func.func @transform_2(%arg0: i32, %arg1: i32) -> (i32, i32, i32) {
    %c0_i32 = arith.constant 0 : i32
    %c0_i32_0 = arith.constant 0 : i32
    return %arg0, %c0_i32, %arg1 : i32, i32, i32
  }
}

</mosaic_0001>

<llo_original>
// kernel: tpu_custom_call.1
$region0: #{tpu_custom_call.1}
  #allocation0 [shape = 'u32[]', space=smem, size = 0x4, offset = 0x4, fixed_abs, tag = 'smem constant byte address 0x4 - core index']
  #allocation1 [shape = 'u32[144,128]{1,0:T(1,128)}', space=vmem, size = 0x12000, scoped, tag = 'internal scratch']
  %s0 = inlined_call_operand.vmem [shape: bf16[2,9,9,32], index: 0, kind: input, shape index: {}]
  %s1 = inlined_call_operand.vmem [shape: bf16[4,32,8], index: 1, kind: input, shape index: {}]
  %s2 = inlined_call_operand.vmem [shape: f32[2,64,8], index: 2, kind: output, shape index: {}]
  %s3 = sld [smem:[#allocation0]]
  $region41: #{tpu_custom_call.1} parent=0
    _
  %s5 = ssub.s32 1, %s3
  %s6 = scalar_select 0, %s5, %s3
  loop: start=0, step=1, limit=4
  $region2: #{tpu_custom_call.1} parent=0 // loop_pre_header
    _
  $region3: #{tpu_custom_call.1} parent=0 // loop_header
    %s8 = sphi 0, %s12
    %p9 = scmp.ge.s32.totalorder %s8, 4
    %s15 = sphi 0, %s27
    %s16 = sphi 0, %s23
    %s17 = sphi 0, %s15
    %s18 = sphi 0, %s16
    %s19 = sphi 0, %s17
    %s20 = sphi 0, %s18
    %s30 = sphi 0, %s32
    %s33 = sphi 0, %s30
    %s34 = sphi 0, %s33
    %s50 = sphi 0, %s34
    %s56 = sphi 0, %s58
    %s59 = sphi 0, %s56
    %s60 = sphi 0, %s59
    %s76 = sphi 0, %s60
    %s84 = sphi 0, %s86
    %s87 = sphi 0, %s84
    %s88 = sphi 0, %s87
    %s104 = sphi 0, %s88
  $region4: #{tpu_custom_call.1} parent=0 // loop_header_branch
    %11 = sbr.rel (%p9) target = $region8
  $region5: #{tpu_custom_call.1} parent=0 // loop_body
    %s13 = ssub.s32 %s8, 1
    %s14 = ssub.s32 %s8, 2
    %s21 = sadd.s32 1, %s16
    %p22 = scmp.ge.s32.totalorder %s21, 1
    %s23 = scalar_select %p22, 0, %s21
    %s24 = sadd.s32 1, %s15
    %s25 = scalar_select %p22, %s24, %s15
    %p26 = scmp.ge.s32.totalorder %s25, 2
    %s27 = scalar_select %p26, 0, %s25
    %s28 = ssub.s32 %s15, %s27
    %p29 = scmp.eq.s32.totalorder %s28, 0
    %s31 = sadd.s32 %s30, 1
    %s32 = scalar_select %p29, %s30, %s31
    %p35 = pneg %p29
    %p36 = scmp.eq.s32.totalorder %s8, 1
    %p37 = por %p35, %p36
    %p38 = scmp.ne.s32.totalorder %s30, %s33
    %p39 = scmp.eq.s32.totalorder %s8, 0
    %p40 = por %p38, %p39
    %p41 = scmp.ne.s32.totalorder %s30, %s33
    %p42 = scmp.eq.s32.totalorder %s13, 1
    %p43 = por %p41, %p42
    %p44 = scmp.ne.s32.totalorder %s33, %s34
    %p45 = scmp.eq.s32.totalorder %s13, 0
    %p46 = por %p44, %p45
    %p47 = scmp.ne.s32.totalorder %s33, %s34
    %p48 = scmp.eq.s32.totalorder %s14, 1
    %p49 = por %p47, %p48
    %p51 = scmp.ne.s32.totalorder %s34, %s50
    %p52 = scmp.eq.s32.totalorder %s14, 0
    %p53 = por %p51, %p52
    %s54 = ssub.s32 %s16, %s23
    %p55 = scmp.eq.s32.totalorder %s54, 0
    %s57 = sadd.s32 %s56, 1
    %s58 = scalar_select %p55, %s56, %s57
    %p61 = pneg %p55
    %p62 = scmp.eq.s32.totalorder %s8, 1
    %p63 = por %p61, %p62
    %p64 = scmp.ne.s32.totalorder %s56, %s59
    %p65 = scmp.eq.s32.totalorder %s8, 0
    %p66 = por %p64, %p65
    %p67 = scmp.ne.s32.totalorder %s56, %s59
    %p68 = scmp.eq.s32.totalorder %s13, 1
    %p69 = por %p67, %p68
    %p70 = scmp.ne.s32.totalorder %s59, %s60
    %p71 = scmp.eq.s32.totalorder %s13, 0
    %p72 = por %p70, %p71
    %p73 = scmp.ne.s32.totalorder %s59, %s60
    %p74 = scmp.eq.s32.totalorder %s14, 1
    %p75 = por %p73, %p74
    %p77 = scmp.ne.s32.totalorder %s60, %s76
    %p78 = scmp.eq.s32.totalorder %s14, 0
    %p79 = por %p77, %p78
    %s80 = ssub.s32 %s15, %s27
    %s81 = ssub.s32 %s16, %s23
    %s82 = sor.u32 %s80, %s81
    %p83 = scmp.eq.s32.totalorder %s82, 0
    %s85 = sadd.s32 %s84, 1
    %s86 = scalar_select %p83, %s84, %s85
    %p89 = pneg %p83
    %p90 = scmp.eq.s32.totalorder %s8, 1
    %p91 = por %p89, %p90
    %p92 = scmp.ne.s32.totalorder %s84, %s87
    %p93 = scmp.eq.s32.totalorder %s8, 0
    %p94 = por %p92, %p93
    %p95 = scmp.ne.s32.totalorder %s84, %s87
    %p96 = scmp.eq.s32.totalorder %s13, 1
    %p97 = por %p95, %p96
    %p98 = scmp.ne.s32.totalorder %s87, %s88
    %p99 = scmp.eq.s32.totalorder %s13, 0
    %p100 = por %p98, %p99
    %p101 = scmp.ne.s32.totalorder %s87, %s88
    %p102 = scmp.eq.s32.totalorder %s14, 1
    %p103 = por %p101, %p102
    %p105 = scmp.ne.s32.totalorder %s88, %s104
    %p106 = scmp.eq.s32.totalorder %s14, 0
    %p107 = por %p105, %p106
    %p108 = scmp.le.s32.totalorder 1, %s8
    %p109 = scmp.lt.s32.totalorder %s8, 3
    %p110 = pnand %p108, %p109
    %p111 = pneg %p110
    // Predicated region
    $region9: #{tpu_custom_call.1} parent=5 // pred_check
      _
    $region10: #{tpu_custom_call.1} parent=5 // pred_check_branch
      %113 = sbr.rel (%p110) target = $region12
    $region11: #{tpu_custom_call.1} parent=5 // pred_region
      %s114 = ssub.s32 %s8, 1
      // Predicated region
      $region13: #{tpu_custom_call.1} parent=11 // pred_check
        %p115 = pneg %p72
      $region14: #{tpu_custom_call.1} parent=11 // pred_check_branch
        %117 = sbr.rel (%p115) target = $region16
      $region15: #{tpu_custom_call.1} parent=11 // pred_region
        %p118 = scmp.lt.s32.totalorder %s18, 0
        %s119 = scalar_select %p118, %s18, 0
        %s120 = smul.addr %s119, 4
        %s121 = scalar_lea.vmem %s1, %s120
      $region16: #{tpu_custom_call.1} parent=11 // pred_fallthru
        _
    $region12: #{tpu_custom_call.1} parent=5 // pred_fallthru
      _
    %p122 = scmp.lt.s32.totalorder %s8, 2
    // Predicated region
    $region17: #{tpu_custom_call.1} parent=5 // pred_check
      %p123 = pneg %p122
    $region18: #{tpu_custom_call.1} parent=5 // pred_check_branch
      %125 = sbr.rel (%p123) target = $region20
    $region19: #{tpu_custom_call.1} parent=5 // pred_region
      // Predicated region
      $region21: #{tpu_custom_call.1} parent=19 // pred_check
        %p126 = pneg %p40
      $region22: #{tpu_custom_call.1} parent=19 // pred_check_branch
        %128 = sbr.rel (%p126) target = $region24
      $region23: #{tpu_custom_call.1} parent=19 // pred_region
        %p129 = scmp.lt.s32.totalorder %s15, 1
        %s130 = scalar_select %p129, %s15, 1
        %s131 = smul.addr %s130, 18
        %s132 = smul.addr %s131, 4
        %s133 = scalar_lea.vmem %s0, %s132
      $region24: #{tpu_custom_call.1} parent=19 // pred_fallthru
        _
    $region20: #{tpu_custom_call.1} parent=5 // pred_fallthru
      _
    %p134 = scmp.le.s32.totalorder 1, %s8
    %p135 = scmp.lt.s32.totalorder %s8, 3
    %p136 = pnand %p134, %p135
    %p137 = pneg %p136
    // Predicated region
    $region25: #{tpu_custom_call.1} parent=5 // pred_check
      _
    $region26: #{tpu_custom_call.1} parent=5 // pred_check_branch
      %139 = sbr.rel (%p136) target = $region28
    $region27: #{tpu_custom_call.1} parent=5 // pred_region
      %s140 = ssub.s32 %s8, 1
      %p141 = scmp.lt.s32.totalorder %s17, 1
      %s142 = scalar_select %p141, %s17, 1
      %s143 = smul.addr %s142, 18
      %s144 = smul.addr %s143, 4
      %s145 = scalar_lea.vmem %s0, %s144
      %p146 = pneg %p46
      %p147 = pneg %p43
      %p148 = scmp.lt.s32.totalorder %s18, 0
      %s149 = scalar_select %p148, %s18, 0
      %s150 = smul.addr %s149, 4
      %s151 = scalar_lea.vmem %s1, %s150
      %p152 = pneg %p72
      %p153 = pneg %p69
      %p154 = pneg %p100
      %p155 = pneg %p97
      %p156 = scmp.lt.s32.totalorder %s17, 1
      %s157 = scalar_select %p156, %s17, 1
      %p158 = scmp.lt.s32.totalorder %s18, 0
      %s159 = scalar_select %p158, %s18, 0
      %s160 = smul.addr %s157, 8
      %s161 = sadd.s32 %s159, %s160
      %s162 = smul.addr %s161, 8
      %s163 = scalar_lea.vmem %s2, %s162
      %p164 = scmp.lt.s32.totalorder %s17, 1
      %s165 = scalar_select %p164, %s17, 1
      %s166 = smul.addr %s165, 18
      %s167 = smul.addr %s166, 4
      %s168 = scalar_lea.vmem %s0, %s167
      %p169 = scmp.lt.s32.totalorder %s18, 0
      %s170 = scalar_select %p169, %s18, 0
      %s171 = smul.addr %s170, 4
      %s172 = scalar_lea.vmem %s1, %s171
      %p173 = scmp.lt.s32.totalorder %s17, 1
      %s174 = scalar_select %p173, %s17, 1
      %p175 = scmp.lt.s32.totalorder %s18, 0
      %s176 = scalar_select %p175, %s18, 0
      %s177 = smul.addr %s174, 8
      %s178 = sadd.s32 %s176, %s177
      %s179 = smul.addr %s178, 8
      %s180 = scalar_lea.vmem %s2, %s179
      %v182 = vld [vmem:[%s168] sm:$0xf]
      %v183 = vld [vmem:[%s168 + $0x4] sm:$0x1]
      %v184 = vld [vmem:[%s168 + $0x8] sm:$0xf]
      %v185 = vld [vmem:[%s168 + $0xc] sm:$0x1]
      %v186 = vld [vmem:[%s168 + $0x10] sm:$0xf]
      %v187 = vld [vmem:[%s168 + $0x14] sm:$0x1]
      %v188 = vld [vmem:[%s168 + $0x18] sm:$0xf]
      %v189 = vld [vmem:[%s168 + $0x1c] sm:$0x1]
      %v190 = vld [vmem:[%s168 + $0x20] sm:$0xf]
      %v191 = vld [vmem:[%s168 + $0x24] sm:$0x1]
      %v192 = vld [vmem:[%s168 + $0x28] sm:$0xf]
      %v193 = vld [vmem:[%s168 + $0x2c] sm:$0x1]
      %v194 = vld [vmem:[%s168 + $0x30] sm:$0xf]
      %v195 = vld [vmem:[%s168 + $0x34] sm:$0x1]
      %v196 = vld [vmem:[%s168 + $0x38] sm:$0xf]
      %v197 = vld [vmem:[%s168 + $0x3c] sm:$0x1]
      %v198 = vld [vmem:[%s168 + $0x40] sm:$0xf]
      %v199 = vld [vmem:[%s168 + $0x44] sm:$0x1]
      %v200 = vld [vmem:[%s172] sm:$0xf]
      %v201 = vld [vmem:[%s172 + $0x4] sm:$0xf]
      %v202 = vld [vmem:[%s172 + $0x8] sm:$0xf]
      %v203 = vld [vmem:[%s172 + $0xc] sm:$0xf]
      %vm204 = vsmask.f32 3328
      %vm205 = vsmask.f32 7440
      %vm206 = vmor %vm204, %vm205
      %v208 = vshrl.u32 %v182, 16
      %v210 = vrot.slane %v208, 4
      %v211 = vshll.u32 %v182, 16
      %v213 = vrot.slane %v211, 5
      %v214 = vor.u32 %v210, %v213
      %v215 = vrot.slane %v214, 4
      %v217 = vshll.u32 %v183, 16
      %v219 = vrot.slane %v217, 5
      %v220 = vsel %vm206, %v215, %v219
      %v222 = vshrl.u32 %v184, 16
      %v224 = vrot.slane %v222, 4
      %v225 = vshll.u32 %v184, 16
      %v227 = vrot.slane %v225, 5
      %v228 = vor.u32 %v224, %v227
      %v229 = vrot.slane %v228, 4
      %v231 = vshll.u32 %v185, 16
      %v233 = vrot.slane %v231, 5
      %v234 = vsel %vm206, %v229, %v233
      %v236 = vshrl.u32 %v186, 16
      %v238 = vrot.slane %v236, 4
      %v239 = vshll.u32 %v186, 16
      %v241 = vrot.slane %v239, 5
      %v242 = vor.u32 %v238, %v241
      %v243 = vrot.slane %v242, 4
      %v245 = vshll.u32 %v187, 16
      %v247 = vrot.slane %v245, 5
      %v248 = vsel %vm206, %v243, %v247
      %v250 = vshrl.u32 %v188, 16
      %v252 = vrot.slane %v250, 4
      %v253 = vshll.u32 %v188, 16
      %v255 = vrot.slane %v253, 5
      %v256 = vor.u32 %v252, %v255
      %v257 = vrot.slane %v256, 4
      %v259 = vshll.u32 %v189, 16
      %v261 = vrot.slane %v259, 5
      %v262 = vsel %vm206, %v257, %v261
      %v264 = vshrl.u32 %v190, 16
      %v266 = vrot.slane %v264, 4
      %v267 = vshll.u32 %v190, 16
      %v269 = vrot.slane %v267, 5
      %v270 = vor.u32 %v266, %v269
      %v271 = vrot.slane %v270, 4
      %v273 = vshll.u32 %v191, 16
      %v275 = vrot.slane %v273, 5
      %v276 = vsel %vm206, %v271, %v275
      %v278 = vshrl.u32 %v192, 16
      %v280 = vrot.slane %v278, 4
      %v281 = vshll.u32 %v192, 16
      %v283 = vrot.slane %v281, 5
      %v284 = vor.u32 %v280, %v283
      %v285 = vrot.slane %v284, 4
      %v287 = vshll.u32 %v193, 16
      %v289 = vrot.slane %v287, 5
      %v290 = vsel %vm206, %v285, %v289
      %v292 = vshrl.u32 %v194, 16
      %v294 = vrot.slane %v292, 4
      %v295 = vshll.u32 %v194, 16
      %v297 = vrot.slane %v295, 5
      %v298 = vor.u32 %v294, %v297
      %v299 = vrot.slane %v298, 4
      %v301 = vshll.u32 %v195, 16
      %v303 = vrot.slane %v301, 5
      %v304 = vsel %vm206, %v299, %v303
      %v306 = vshrl.u32 %v196, 16
      %v308 = vrot.slane %v306, 4
      %v309 = vshll.u32 %v196, 16
      %v311 = vrot.slane %v309, 5
      %v312 = vor.u32 %v308, %v311
      %v313 = vrot.slane %v312, 4
      %v315 = vshll.u32 %v197, 16
      %v317 = vrot.slane %v315, 5
      %v318 = vsel %vm206, %v313, %v317
      %s319 = scalar_lea.vmem %s172, 16
      %v320 = vld [vmem:[%s319] sm:$0xf]
      %v321 = vld [vmem:[%s319 + $0x4] sm:$0xf]
      %v322 = vld [vmem:[%s319 + $0x8] sm:$0xf]
      %v323 = vld [vmem:[%s319 + $0xc] sm:$0xf]
      %v324 = vunpack.c.l.b16 %v220
      %v325 = vunpack.c.l.b16 %v234
      %v326 = vunpack.c.l.b16 %v248
      %v327 = vunpack.c.l.b16 %v262
      %v328 = vunpack.c.l.b16 %v276
      %v329 = vunpack.c.l.b16 %v290
      %v330 = vunpack.c.l.b16 %v304
      %v331 = vunpack.c.l.b16 %v318
      %v332 = vpack.c.b16 %v325, %v324
      %v333 = vpack.c.b16 %v327, %v326
      %v334 = vpack.c.b16 %v329, %v328
      %v335 = vpack.c.b16 %v331, %v330
      %v340 = vunpack.c.l.b16 %v320
      %v341 = vunpack.c.l.b16 %v321
      %v342 = vunpack.c.l.b16 %v322
      %v343 = vunpack.c.l.b16 %v323
      %v344 = vpack.c.b16 %v341, %v340
      %v345 = vpack.c.b16 %v343, %v342
      %vm348 = vcmask 261120
      %v350 = vsel %vm348, %v332, 0
      %v353 = vsel %vm348, %v333, 0
      %v356 = vsel %vm348, %v334, 0
      %v359 = vsel %vm348, %v335, 0
      %361 = vmatprep.subr.bf16.mxu0 0
      %362 = vmatpush1.bf16.msra.mxu0 0
      %363 = vmatprep.subr.bf16.mxu0 0
      %364 = vmatpush1.bf16.msra.mxu0 0
      %365 = vmatprep.subr.bf16.mxu0 0
      %366 = vmatpush1.bf16.msra.mxu0 0
      %367 = vmatprep.subr.bf16.mxu0 0
      %368 = vmatpush1.bf16.msra.mxu0 0
      %369 = vmatprep.subr.bf16.mxu0 0
      %370 = vmatpush1.bf16.msra.mxu0 0
      %371 = vmatprep.subr.bf16.mxu0 0
      %372 = vmatpush1.bf16.msra.mxu0 0
      %373 = vmatprep.subr.bf16.mxu0 0
      %374 = vmatpush1.bf16.msra.mxu0 %v345
      %375 = vmatprep.subr.bf16.mxu0 0
      %376 = vmatpush1.bf16.msra.mxu0 %v344
      %377 = vmatprep.subr.bf16.mxu0 0
      %378 = vmatpush2.bf16.msra.mxu0 0
      %379 = vmatprep.subr.bf16.mxu0 0
      %380 = vmatpush2.bf16.msra.mxu0 0
      %381 = vmatprep.subr.bf16.mxu0 0
      %382 = vmatpush2.bf16.msra.mxu0 0
      %383 = vmatprep.subr.bf16.mxu0 0
      %384 = vmatpush2.bf16.msra.mxu0 0
      %385 = vmatprep.subr.bf16.mxu0 0
      %386 = vmatpush2.bf16.msra.mxu0 0
      %387 = vmatprep.subr.bf16.mxu0 0
      %388 = vmatpush2.bf16.msra.mxu0 0
      %389 = vmatprep.subr.bf16.mxu0 0
      %390 = vmatpush2.bf16.msra.mxu0 0
      %391 = vmatprep.subr.bf16.mxu0 0
      %392 = vmatpush2.bf16.msra.mxu0 0
      %393 = vmatprep.mubr.bf16.mxu0 0
      %394 = vmatmul.mubr.bf16.gmra.mxu0 %v350
      %v395 = vpop.f32.mrf.mxu0
      %v396 = vadd.f32 0.0, %v395
      %v397 = vpop.f32.mrf.mxu0
      %v398 = vpop.f32.mrf.mxu0
      %v399 = vadd.f32 0.0, %v398
      %v400 = vpop.f32.mrf.mxu0
      %401 = vmatprep.mubr.bf16.mxu0 0
      %402 = vmatmul.mubr.bf16.gmra.mxu0 %v353
      %v403 = vpop.f32.mrf.mxu0
      %v404 = vadd.f32 0.0, %v403
      %v405 = vpop.f32.mrf.mxu0
      %v406 = vpop.f32.mrf.mxu0
      %v407 = vadd.f32 0.0, %v406
      %v408 = vpop.f32.mrf.mxu0
      %409 = vmatprep.mubr.bf16.mxu0 0
      %410 = vmatmul.mubr.bf16.gmra.mxu0 %v356
      %v411 = vpop.f32.mrf.mxu0
      %v412 = vadd.f32 0.0, %v411
      %v413 = vpop.f32.mrf.mxu0
      %v414 = vpop.f32.mrf.mxu0
      %v415 = vadd.f32 0.0, %v414
      %v416 = vpop.f32.mrf.mxu0
      %417 = vmatprep.mubr.bf16.mxu0 0
      %418 = vmatmul.mubr.bf16.gmra.mxu0 %v359
      %v419 = vpop.f32.mrf.mxu0
      %v420 = vadd.f32 0.0, %v419
      %v421 = vpop.f32.mrf.mxu0
      %v422 = vpop.f32.mrf.mxu0
      %v423 = vadd.f32 0.0, %v422
      %v424 = vpop.f32.mrf.mxu0
      %425 = vdwg.mxu0
      %v434 = vunpack.c.l.b16 %v182
      %v435 = vunpack.c.l.b16 %v184
      %v436 = vunpack.c.l.b16 %v186
      %v437 = vunpack.c.l.b16 %v188
      %v438 = vunpack.c.l.b16 %v190
      %v439 = vunpack.c.l.b16 %v192
      %v440 = vunpack.c.l.b16 %v194
      %v441 = vunpack.c.l.b16 %v196
      %v442 = vpack.c.b16 %v435, %v434
      %v443 = vpack.c.b16 %v437, %v436
      %v444 = vpack.c.b16 %v439, %v438
      %v445 = vpack.c.b16 %v441, %v440
      %v450 = vunpack.c.l.b16 %v200
      %v451 = vunpack.c.l.b16 %v201
      %v452 = vunpack.c.l.b16 %v202
      %v453 = vunpack.c.l.b16 %v203
      %v454 = vpack.c.b16 %v451, %v450
      %v455 = vpack.c.b16 %v453, %v452
      %v459 = vsel %vm348, %v442, 0
      %v462 = vsel %vm348, %v443, 0
      %v465 = vsel %vm348, %v444, 0
      %v468 = vsel %vm348, %v445, 0
      %470 = vmatprep.subr.bf16.mxu0 0
      %471 = vmatpush1.bf16.msra.mxu0 0
      %472 = vmatprep.subr.bf16.mxu0 0
      %473 = vmatpush1.bf16.msra.mxu0 0
      %474 = vmatprep.subr.bf16.mxu0 0
      %475 = vmatpush1.bf16.msra.mxu0 0
      %476 = vmatprep.subr.bf16.mxu0 0
      %477 = vmatpush1.bf16.msra.mxu0 0
      %478 = vmatprep.subr.bf16.mxu0 0
      %479 = vmatpush1.bf16.msra.mxu0 0
      %480 = vmatprep.subr.bf16.mxu0 0
      %481 = vmatpush1.bf16.msra.mxu0 0
      %482 = vmatprep.subr.bf16.mxu0 0
      %483 = vmatpush1.bf16.msra.mxu0 %v455
      %484 = vmatprep.subr.bf16.mxu0 0
      %485 = vmatpush1.bf16.msra.mxu0 %v454
      %486 = vmatprep.subr.bf16.mxu0 0
      %487 = vmatpush2.bf16.msra.mxu0 0
      %488 = vmatprep.subr.bf16.mxu0 0
      %489 = vmatpush2.bf16.msra.mxu0 0
      %490 = vmatprep.subr.bf16.mxu0 0
      %491 = vmatpush2.bf16.msra.mxu0 0
      %492 = vmatprep.subr.bf16.mxu0 0
      %493 = vmatpush2.bf16.msra.mxu0 0
      %494 = vmatprep.subr.bf16.mxu0 0
      %495 = vmatpush2.bf16.msra.mxu0 0
      %496 = vmatprep.subr.bf16.mxu0 0
      %497 = vmatpush2.bf16.msra.mxu0 0
      %498 = vmatprep.subr.bf16.mxu0 0
      %499 = vmatpush2.bf16.msra.mxu0 0
      %500 = vmatprep.subr.bf16.mxu0 0
      %501 = vmatpush2.bf16.msra.mxu0 0
      %502 = vmatprep.mubr.bf16.mxu0 0
      %503 = vmatmul.mubr.bf16.gmra.mxu0 %v459
      %v504 = vpop.f32.mrf.mxu0
      %v505 = vadd.f32 %v396, %v504
      %v506 = vpop.f32.mrf.mxu0
      %v507 = vpop.f32.mrf.mxu0
      %v508 = vadd.f32 %v399, %v507
      %v509 = vpop.f32.mrf.mxu0
      %510 = vmatprep.mubr.bf16.mxu0 0
      %511 = vmatmul.mubr.bf16.gmra.mxu0 %v462
      %v512 = vpop.f32.mrf.mxu0
      %v513 = vadd.f32 %v404, %v512
      %v514 = vpop.f32.mrf.mxu0
      %v515 = vpop.f32.mrf.mxu0
      %v516 = vadd.f32 %v407, %v515
      %v517 = vpop.f32.mrf.mxu0
      %518 = vmatprep.mubr.bf16.mxu0 0
      %519 = vmatmul.mubr.bf16.gmra.mxu0 %v465
      %v520 = vpop.f32.mrf.mxu0
      %v521 = vadd.f32 %v412, %v520
      %v522 = vpop.f32.mrf.mxu0
      %v523 = vpop.f32.mrf.mxu0
      %v524 = vadd.f32 %v415, %v523
      %v525 = vpop.f32.mrf.mxu0
      %526 = vmatprep.mubr.bf16.mxu0 0
      %527 = vmatmul.mubr.bf16.gmra.mxu0 %v468
      %v528 = vpop.f32.mrf.mxu0
      %v529 = vadd.f32 %v420, %v528
      %v530 = vpop.f32.mrf.mxu0
      %v531 = vpop.f32.mrf.mxu0
      %v532 = vadd.f32 %v423, %v531
      %v533 = vpop.f32.mrf.mxu0
      %534 = vdwg.mxu0
      %s535 = scalar_lea.vmem %s172, 32
      %v536 = vld [vmem:[%s535] sm:$0xf]
      %v537 = vld [vmem:[%s535 + $0x4] sm:$0xf]
      %v538 = vld [vmem:[%s535 + $0x8] sm:$0xf]
      %v539 = vld [vmem:[%s535 + $0xc] sm:$0xf]
      %v541 = vunpack.c.l.b16 %v198
      %v542 = vpack.c.b16 %v436, %v435
      %v543 = vpack.c.b16 %v438, %v437
      %v544 = vpack.c.b16 %v440, %v439
      %v545 = vpack.c.b16 %v541, %v441
      %v550 = vunpack.c.l.b16 %v536
      %v551 = vunpack.c.l.b16 %v537
      %v552 = vunpack.c.l.b16 %v538
      %v553 = vunpack.c.l.b16 %v539
      %v554 = vpack.c.b16 %v551, %v550
      %v555 = vpack.c.b16 %v553, %v552
      %v559 = vsel %vm348, %v542, 0
      %v562 = vsel %vm348, %v543, 0
      %v565 = vsel %vm348, %v544, 0
      %v568 = vsel %vm348, %v545, 0
      %570 = vmatprep.subr.bf16.mxu0 0
      %571 = vmatpush1.bf16.msra.mxu0 0
      %572 = vmatprep.subr.bf16.mxu0 0
      %573 = vmatpush1.bf16.msra.mxu0 0
      %574 = vmatprep.subr.bf16.mxu0 0
      %575 = vmatpush1.bf16.msra.mxu0 0
      %576 = vmatprep.subr.bf16.mxu0 0
      %577 = vmatpush1.bf16.msra.mxu0 0
      %578 = vmatprep.subr.bf16.mxu0 0
      %579 = vmatpush1.bf16.msra.mxu0 0
      %580 = vmatprep.subr.bf16.mxu0 0
      %581 = vmatpush1.bf16.msra.mxu0 0
      %582 = vmatprep.subr.bf16.mxu0 0
      %583 = vmatpush1.bf16.msra.mxu0 %v555
      %584 = vmatprep.subr.bf16.mxu0 0
      %585 = vmatpush1.bf16.msra.mxu0 %v554
      %586 = vmatprep.subr.bf16.mxu0 0
      %587 = vmatpush2.bf16.msra.mxu0 0
      %588 = vmatprep.subr.bf16.mxu0 0
      %589 = vmatpush2.bf16.msra.mxu0 0
      %590 = vmatprep.subr.bf16.mxu0 0
      %591 = vmatpush2.bf16.msra.mxu0 0
      %592 = vmatprep.subr.bf16.mxu0 0
      %593 = vmatpush2.bf16.msra.mxu0 0
      %594 = vmatprep.subr.bf16.mxu0 0
      %595 = vmatpush2.bf16.msra.mxu0 0
      %596 = vmatprep.subr.bf16.mxu0 0
      %597 = vmatpush2.bf16.msra.mxu0 0
      %598 = vmatprep.subr.bf16.mxu0 0
      %599 = vmatpush2.bf16.msra.mxu0 0
      %600 = vmatprep.subr.bf16.mxu0 0
      %601 = vmatpush2.bf16.msra.mxu0 0
      %602 = vmatprep.mubr.bf16.mxu0 0
      %603 = vmatmul.mubr.bf16.gmra.mxu0 %v559
      %v604 = vpop.f32.mrf.mxu0
      %v605 = vadd.f32 0.0, %v604
      %v606 = vpop.f32.mrf.mxu0
      %v607 = vpop.f32.mrf.mxu0
      %v608 = vadd.f32 0.0, %v607
      %v609 = vpop.f32.mrf.mxu0
      %610 = vmatprep.mubr.bf16.mxu0 0
      %611 = vmatmul.mubr.bf16.gmra.mxu0 %v562
      %v612 = vpop.f32.mrf.mxu0
      %v613 = vadd.f32 0.0, %v612
      %v614 = vpop.f32.mrf.mxu0
      %v615 = vpop.f32.mrf.mxu0
      %v616 = vadd.f32 0.0, %v615
      %v617 = vpop.f32.mrf.mxu0
      %618 = vmatprep.mubr.bf16.mxu0 0
      %619 = vmatmul.mubr.bf16.gmra.mxu0 %v565
      %v620 = vpop.f32.mrf.mxu0
      %v621 = vadd.f32 0.0, %v620
      %v622 = vpop.f32.mrf.mxu0
      %v623 = vpop.f32.mrf.mxu0
      %v624 = vadd.f32 0.0, %v623
      %v625 = vpop.f32.mrf.mxu0
      %626 = vmatprep.mubr.bf16.mxu0 0
      %627 = vmatmul.mubr.bf16.gmra.mxu0 %v568
      %v628 = vpop.f32.mrf.mxu0
      %v629 = vadd.f32 0.0, %v628
      %v630 = vpop.f32.mrf.mxu0
      %v631 = vpop.f32.mrf.mxu0
      %v632 = vadd.f32 0.0, %v631
      %v633 = vpop.f32.mrf.mxu0
      %634 = vdwg.mxu0
      %v635 = vadd.f32 %v505, %v605
      %v636 = vadd.f32 %v508, %v608
      %v637 = vadd.f32 %v513, %v613
      %v638 = vadd.f32 %v516, %v616
      %v639 = vadd.f32 %v521, %v621
      %v640 = vadd.f32 %v524, %v624
      %v641 = vadd.f32 %v529, %v629
      %v642 = vadd.f32 %v532, %v632
      %v644 = vshrl.u32 %v198, 16
      %v646 = vrot.slane %v644, 4
      %v647 = vshll.u32 %v198, 16
      %v649 = vrot.slane %v647, 5
      %v650 = vor.u32 %v646, %v649
      %v651 = vrot.slane %v650, 4
      %v653 = vshll.u32 %v199, 16
      %v655 = vrot.slane %v653, 5
      %v656 = vsel %vm206, %v651, %v655
      %s657 = scalar_lea.vmem %s172, 48
      %v658 = vld [vmem:[%s657] sm:$0xf]
      %v659 = vld [vmem:[%s657 + $0x4] sm:$0xf]
      %v660 = vld [vmem:[%s657 + $0x8] sm:$0xf]
      %v661 = vld [vmem:[%s657 + $0xc] sm:$0xf]
      %v662 = vunpack.c.l.b16 %v656
      %v663 = vpack.c.b16 %v326, %v325
      %v664 = vpack.c.b16 %v328, %v327
      %v665 = vpack.c.b16 %v330, %v329
      %v666 = vpack.c.b16 %v662, %v331
      %v671 = vunpack.c.l.b16 %v658
      %v672 = vunpack.c.l.b16 %v659
      %v673 = vunpack.c.l.b16 %v660
      %v674 = vunpack.c.l.b16 %v661
      %v675 = vpack.c.b16 %v672, %v671
      %v676 = vpack.c.b16 %v674, %v673
      %v680 = vsel %vm348, %v663, 0
      %v683 = vsel %vm348, %v664, 0
      %v686 = vsel %vm348, %v665, 0
      %v689 = vsel %vm348, %v666, 0
      %691 = vmatprep.subr.bf16.mxu0 0
      %692 = vmatpush1.bf16.msra.mxu0 0
      %693 = vmatprep.subr.bf16.mxu0 0
      %694 = vmatpush1.bf16.msra.mxu0 0
      %695 = vmatprep.subr.bf16.mxu0 0
      %696 = vmatpush1.bf16.msra.mxu0 0
      %697 = vmatprep.subr.bf16.mxu0 0
      %698 = vmatpush1.bf16.msra.mxu0 0
      %699 = vmatprep.subr.bf16.mxu0 0
      %700 = vmatpush1.bf16.msra.mxu0 0
      %701 = vmatprep.subr.bf16.mxu0 0
      %702 = vmatpush1.bf16.msra.mxu0 0
      %703 = vmatprep.subr.bf16.mxu0 0
      %704 = vmatpush1.bf16.msra.mxu0 %v676
      %705 = vmatprep.subr.bf16.mxu0 0
      %706 = vmatpush1.bf16.msra.mxu0 %v675
      %707 = vmatprep.subr.bf16.mxu0 0
      %708 = vmatpush2.bf16.msra.mxu0 0
      %709 = vmatprep.subr.bf16.mxu0 0
      %710 = vmatpush2.bf16.msra.mxu0 0
      %711 = vmatprep.subr.bf16.mxu0 0
      %712 = vmatpush2.bf16.msra.mxu0 0
      %713 = vmatprep.subr.bf16.mxu0 0
      %714 = vmatpush2.bf16.msra.mxu0 0
      %715 = vmatprep.subr.bf16.mxu0 0
      %716 = vmatpush2.bf16.msra.mxu0 0
      %717 = vmatprep.subr.bf16.mxu0 0
      %718 = vmatpush2.bf16.msra.mxu0 0
      %719 = vmatprep.subr.bf16.mxu0 0
      %720 = vmatpush2.bf16.msra.mxu0 0
      %721 = vmatprep.subr.bf16.mxu0 0
      %722 = vmatpush2.bf16.msra.mxu0 0
      %723 = vmatprep.mubr.bf16.mxu0 0
      %724 = vmatmul.mubr.bf16.gmra.mxu0 %v680
      %v725 = vpop.f32.mrf.mxu0
      %v726 = vadd.f32 0.0, %v725
      %v727 = vpop.f32.mrf.mxu0
      %v728 = vpop.f32.mrf.mxu0
      %v729 = vadd.f32 0.0, %v728
      %v730 = vpop.f32.mrf.mxu0
      %731 = vmatprep.mubr.bf16.mxu0 0
      %732 = vmatmul.mubr.bf16.gmra.mxu0 %v683
      %v733 = vpop.f32.mrf.mxu0
      %v734 = vadd.f32 0.0, %v733
      %v735 = vpop.f32.mrf.mxu0
      %v736 = vpop.f32.mrf.mxu0
      %v737 = vadd.f32 0.0, %v736
      %v738 = vpop.f32.mrf.mxu0
      %739 = vmatprep.mubr.bf16.mxu0 0
      %740 = vmatmul.mubr.bf16.gmra.mxu0 %v686
      %v741 = vpop.f32.mrf.mxu0
      %v742 = vadd.f32 0.0, %v741
      %v743 = vpop.f32.mrf.mxu0
      %v744 = vpop.f32.mrf.mxu0
      %v745 = vadd.f32 0.0, %v744
      %v746 = vpop.f32.mrf.mxu0
      %747 = vmatprep.mubr.bf16.mxu0 0
      %748 = vmatmul.mubr.bf16.gmra.mxu0 %v689
      %v749 = vpop.f32.mrf.mxu0
      %v750 = vadd.f32 0.0, %v749
      %v751 = vpop.f32.mrf.mxu0
      %v752 = vpop.f32.mrf.mxu0
      %v753 = vadd.f32 0.0, %v752
      %v754 = vpop.f32.mrf.mxu0
      %755 = vdwg.mxu0
      %v756 = vadd.f32 %v635, %v726
      %v757 = vadd.f32 %v636, %v729
      %v758 = vadd.f32 %v637, %v734
      %v759 = vadd.f32 %v638, %v737
      %v760 = vadd.f32 %v639, %v742
      %v761 = vadd.f32 %v640, %v745
      %v762 = vadd.f32 %v641, %v750
      %v763 = vadd.f32 %v642, %v753
      %vm764 = vcmask 64512
      %v765 = vsel %vm764, %v756, 0.0
      %v766 = vsel %vm764, %v757, 0.0
      %v767 = vadd.f32 %v765, %v766
      %v768 = vsel %vm764, %v758, 0.0
      %v769 = vadd.f32 %v767, %v768
      %v770 = vsel %vm764, %v759, 0.0
      %v771 = vadd.f32 %v769, %v770
      %v772 = vsel %vm764, %v760, 0.0
      %v773 = vadd.f32 %v771, %v772
      %v774 = vsel %vm764, %v761, 0.0
      %v775 = vadd.f32 %v773, %v774
      %v776 = vsel %vm764, %v762, 0.0
      %v777 = vadd.f32 %v775, %v776
      %v778 = vsel %vm764, %v763, 0.0
      %v779 = vadd.f32 %v777, %v778
      %v780 = vrot.slane %v779, 4
      %v781 = vadd.f32 %v779, %v780
      %v782 = vrot.slane %v781, 2
      %v783 = vadd.f32 %v781, %v782
      %v784 = vrot.slane %v783, 1
      %v785 = vadd.f32 %v783, %v784
      %v786 = vrcp.pop 64.0
      %v787 = vmul.f32 %v785, %v786
      %v788 = vsub.f32 %v756, %v787
      %v789 = vsub.f32 %v757, %v787
      %v790 = vsub.f32 %v758, %v787
      %v791 = vsub.f32 %v759, %v787
      %v792 = vsub.f32 %v760, %v787
      %v793 = vsub.f32 %v761, %v787
      %v794 = vsub.f32 %v762, %v787
      %v795 = vsub.f32 %v763, %v787
      %v796 = vmul.f32 %v788, %v788
      %v797 = vmul.f32 %v789, %v789
      %v798 = vmul.f32 %v790, %v790
      %v799 = vmul.f32 %v791, %v791
      %v800 = vmul.f32 %v792, %v792
      %v801 = vmul.f32 %v793, %v793
      %v802 = vmul.f32 %v794, %v794
      %v803 = vmul.f32 %v795, %v795
      %v804 = vsel %vm764, %v796, 0.0
      %v805 = vsel %vm764, %v797, 0.0
      %v806 = vadd.f32 %v804, %v805
      %v807 = vsel %vm764, %v798, 0.0
      %v808 = vadd.f32 %v806, %v807
      %v809 = vsel %vm764, %v799, 0.0
      %v810 = vadd.f32 %v808, %v809
      %v811 = vsel %vm764, %v800, 0.0
      %v812 = vadd.f32 %v810, %v811
      %v813 = vsel %vm764, %v801, 0.0
      %v814 = vadd.f32 %v812, %v813
      %v815 = vsel %vm764, %v802, 0.0
      %v816 = vadd.f32 %v814, %v815
      %v817 = vsel %vm764, %v803, 0.0
      %v818 = vadd.f32 %v816, %v817
      %v819 = vrot.slane %v818, 4
      %v820 = vadd.f32 %v818, %v819
      %v821 = vrot.slane %v820, 2
      %v822 = vadd.f32 %v820, %v821
      %v823 = vrot.slane %v822, 1
      %v824 = vadd.f32 %v822, %v823
      %v825 = vmul.f32 %v824, %v786
      %v826 = vadd.f32 %v825, 1e-05
      %v827 = vrsqrt.pop %v826
      %v828 = vmul.f32 %v788, %v827
      %v829 = vmul.f32 %v789, %v827
      %v830 = vmul.f32 %v790, %v827
      %v831 = vmul.f32 %v791, %v827
      %v832 = vmul.f32 %v792, %v827
      %v833 = vmul.f32 %v793, %v827
      %v834 = vmul.f32 %v794, %v827
      %v835 = vmul.f32 %v795, %v827
      %836 = vst.msk [vmem:[%s180] sm:$0xff] %vm764, %v828
      %837 = vst.msk [vmem:[%s180 + $0x8] sm:$0xff] %vm764, %v829
      %838 = vst.msk [vmem:[%s180 + $0x10] sm:$0xff] %vm764, %v830
      %839 = vst.msk [vmem:[%s180 + $0x18] sm:$0xff] %vm764, %v831
      %840 = vst.msk [vmem:[%s180 + $0x20] sm:$0xff] %vm764, %v832
      %841 = vst.msk [vmem:[%s180 + $0x28] sm:$0xff] %vm764, %v833
      %842 = vst.msk [vmem:[%s180 + $0x30] sm:$0xff] %vm764, %v834
      %843 = vst.msk [vmem:[%s180 + $0x38] sm:$0xff] %vm764, %v835
      %p844 = scmp.lt.s32.totalorder %s17, 1
      %s845 = scalar_select %p844, %s17, 1
      %p846 = scmp.lt.s32.totalorder %s18, 0
      %s847 = scalar_select %p846, %s18, 0
      %s848 = smul.addr %s845, 8
      %s849 = sadd.s32 %s847, %s848
      %s850 = smul.addr %s849, 8
      %s851 = scalar_lea.vmem %s2, %s850
      // Predicated region
      $region29: #{tpu_custom_call.1} parent=27 // pred_check
        %p852 = pneg %p97
      $region30: #{tpu_custom_call.1} parent=27 // pred_check_branch
        %854 = sbr.rel (%p852) target = $region32
      $region31: #{tpu_custom_call.1} parent=27 // pred_region
        _
      $region32: #{tpu_custom_call.1} parent=27 // pred_fallthru
        _
    $region28: #{tpu_custom_call.1} parent=5 // pred_fallthru
      _
    %p855 = scmp.le.s32.totalorder 2, %s8
    // Predicated region
    $region33: #{tpu_custom_call.1} parent=5 // pred_check
      %p856 = pneg %p855
    $region34: #{tpu_custom_call.1} parent=5 // pred_check_branch
      %858 = sbr.rel (%p856) target = $region36
    $region35: #{tpu_custom_call.1} parent=5 // pred_region
      %s859 = ssub.s32 %s8, 2
      // Predicated region
      $region37: #{tpu_custom_call.1} parent=35 // pred_check
        %p860 = pneg %p103
      $region38: #{tpu_custom_call.1} parent=35 // pred_check_branch
        %862 = sbr.rel (%p860) target = $region40
      $region39: #{tpu_custom_call.1} parent=35 // pred_region
        %p863 = scmp.lt.s32.totalorder %s19, 1
        %s864 = scalar_select %p863, %s19, 1
        %p865 = scmp.lt.s32.totalorder %s20, 0
        %s866 = scalar_select %p865, %s20, 0
        %s867 = smul.addr %s864, 8
        %s868 = sadd.s32 %s866, %s867
        %s869 = smul.addr %s868, 8
        %s870 = scalar_lea.vmem %s2, %s869
      $region40: #{tpu_custom_call.1} parent=35 // pred_fallthru
        _
    $region36: #{tpu_custom_call.1} parent=5 // pred_fallthru
      _
  $region6: #{tpu_custom_call.1} parent=0 // loop_footer
    %s12 = sadd.s32 1, %s8
  $region7: #{tpu_custom_call.1} parent=0 // loop_footer_branch
    %7 = sbr.rel target = $region3
  $region8: #{tpu_custom_call.1} parent=0 // loop_exit
    _

</llo_original>
